<compile_context>
chip_gen: v6e
topology: v6e:2x2x1
jax: 0.10.0
libtpu: 0.0.40
codegen_flags: <defaults>
</compile_context>

<pallas_src>
import jax
import jax.numpy as jnp
from jax import lax
from jax.experimental import pallas as pl
from jax.experimental.pallas import tpu as pltpu

DIM = 32        # hparams['model']['dim']  (small, synthetic)
VOCAB = 32      # vocab_size               (small, synthetic)


def _round_up(x, m):
    return (x + m - 1) // m * m


# ----------------------------- Pallas kernel -------------------------------

def _ctc_head_kernel(x_ref, w_ref, b_ref, o_ref):
    # x_ref: (1, DIM, tt) bf16   w_ref: (V, DIM) bf16   b_ref: (V, 1) f32
    # o_ref: (1, V,  tt) f32
    logits = jnp.dot(w_ref[...], x_ref[0],
                     preferred_element_type=jnp.float32) + b_ref[...]
    m = jnp.max(logits, axis=0, keepdims=True)            # reduce over vocab (sublanes)
    s = logits - m
    lse = jnp.log(jnp.sum(jnp.exp(s), axis=0, keepdims=True))
    o_ref[0] = (s - lse).astype(o_ref.dtype)               # lane-dense (V, tt) store


def ctc_head_log_softmax(c, w, b, *, t_tile=None):
    """c: (B, DIM, T) f32; w: (VOCAB, DIM, 1) (PyTorch Conv1d weight); b: (VOCAB,).

    Returns (B, VOCAB, T) log-probabilities (log_softmax over the vocab axis),
    matching `Conv1d(DIM, VOCAB, 1)(c).log_softmax(dim=1)` (MXU feed in bf16,
    f32 accumulation / softmax / output).
    """
    B, D, T = c.shape
    V = w.shape[0]

    # Time-tile: == T for small T (full-extent block satisfies the (8,128)
    # rule), otherwise a multiple of 128 up to 4096.  Partial last block is
    # handled by Pallas (masked writeback; columns are independent).
    if t_tile is None:
        if T < 128:
            t_tile = T
        else:
            cap = 4096
            if B == 1:
                # keep >=2 time blocks so both v7x TensorCores get work
                cap = min(cap, max(128, _round_up(pl.cdiv(T, 2), 128)))
            t_tile = min(cap, (T // 128) * 128)

    x_bf = c.astype(jnp.bfloat16)                       # halve activation read bytes
    w2 = w[:, :, 0].astype(jnp.bfloat16)                # (V, DIM)
    b2 = b.astype(jnp.float32).reshape(V, 1)            # (V, 1), broadcast over time

    grid = (B, pl.cdiv(T, t_tile))
    out = pl.pallas_call(
        _ctc_head_kernel,
        out_shape=jax.ShapeDtypeStruct((B, V, T), jnp.float32),
        grid_spec=pltpu.PrefetchScalarGridSpec(
            num_scalar_prefetch=0,
            grid=grid,
            in_specs=[
                pl.BlockSpec((1, D, t_tile), lambda bi, ti: (bi, 0, ti)),  # activations
                pl.BlockSpec((V, D), lambda bi, ti: (0, 0)),               # weight (resident)
                pl.BlockSpec((V, 1), lambda bi, ti: (0, 0)),               # bias   (resident)
            ],
            out_specs=pl.BlockSpec((1, V, t_tile), lambda bi, ti: (bi, 0, ti)),
        ),
        compiler_params=pltpu.CompilerParams(
            dimension_semantics=("parallel", "parallel")),
    )(x_bf, w2, b2)
    return out                                           # already (B, V, T), no slice


# --------------------------- base model (glue) ------------------------------
# TODO(synk): the wav2vec `base_model` architecture is not given in the module;
# a minimal deterministic conv feature-encoder + context stand-in is used here
# (plain JAX glue) so that `c` has the expected (B, DIM, T) layout.

def _conv1d(x, w, b, stride, padding):
    # x: (B, C_in, L), w: (C_out, C_in, K) -- NCW / OIW, matching PyTorch.
    y = lax.conv_general_dilated(
        x, w, window_strides=(stride,), padding=padding,
        dimension_numbers=("NCH", "OIH", "NCH"))
    return y + b[None, :, None]


def wav2vec_base(params, x):
    # x: (B, 1, L) raw waveform -> (z, c) with c: (B, DIM, T)
    z = jax.nn.relu(_conv1d(x, params["enc1_w"], params["enc1_b"], 5, "VALID"))
    z = jax.nn.relu(_conv1d(z, params["enc2_w"], params["enc2_b"], 4, "VALID"))
    c = jax.nn.relu(_conv1d(z, params["ctx_w"], params["ctx_b"], 1, [(1, 1)]))
    return z, c


def init_params(key):
    ks = jax.random.split(key, 8)
    s = 0.05
    return {
        "enc1_w": s * jax.random.normal(ks[0], (DIM, 1, 10), jnp.float32),
        "enc1_b": s * jax.random.normal(ks[1], (DIM,), jnp.float32),
        "enc2_w": s * jax.random.normal(ks[2], (DIM, DIM, 8), jnp.float32),
        "enc2_b": s * jax.random.normal(ks[3], (DIM,), jnp.float32),
        "ctx_w":  s * jax.random.normal(ks[4], (DIM, DIM, 3), jnp.float32),
        "ctx_b":  s * jax.random.normal(ks[5], (DIM,), jnp.float32),
        # CTC head: nn.Conv1d(DIM, vocab_size, kernel_size=1)
        "head_w": s * jax.random.normal(ks[6], (VOCAB, DIM, 1), jnp.float32),
        "head_b": s * jax.random.normal(ks[7], (VOCAB,), jnp.float32),
    }


def wav2vec_ctc_forward(params, x):
    _, c = wav2vec_base(params, x)
    return ctc_head_log_softmax(c, params["head_w"], params["head_b"])


# --------------------------------- main -------------------------------------

if __name__ == "__main__":
    key = jax.random.PRNGKey(0)
    params = init_params(key)

    # L = 345 -> encoder output T = 16, so the head runs a (2, 1) grid.
    B, L = 2, 345
    x = jax.random.normal(jax.random.PRNGKey(1), (B, 1, L), jnp.float32)

    fwd = jax.jit(wav2vec_ctc_forward)
    out = jax.block_until_ready(fwd(params, x))

    # Pure-JAX reference of the CTC head.
    _, c = wav2vec_base(params, x)
    w_flat = params["head_w"][:, :, 0]
    bias = params["head_b"][None, :, None]

    # (a) Reference with the same bf16-rounded MXU operands, f32 accumulation.
    c_bf = c.astype(jnp.bfloat16).astype(jnp.float32)
    w_bf = w_flat.astype(jnp.bfloat16).astype(jnp.float32)
    logits_bf = jnp.einsum("vd,bdt->bvt", w_bf, c_bf) + bias
    ref_bf = jax.nn.log_softmax(logits_bf, axis=1)

    # (b) Full-f32 reference (PyTorch semantics), looser tolerance for bf16 feed.
    logits_f32 = jnp.einsum("vd,bdt->bvt", w_flat, c) + bias
    ref_f32 = jax.nn.log_softmax(logits_f32, axis=1)

    assert out.shape == (B, VOCAB, 16), out.shape
    assert jnp.allclose(out, ref_bf, atol=1e-4, rtol=1e-4), \
        float(jnp.max(jnp.abs(out - ref_bf)))
    assert jnp.allclose(out, ref_f32, atol=3e-2, rtol=3e-2), \
        float(jnp.max(jnp.abs(out - ref_f32)))

    print("KERNEL_OK")
</pallas_src>

<mosaic_0001>
module attributes {stable_mosaic.version = 11 : i64} {
  func.func @_ctc_head_kernel(%arg0: i32, %arg1: i32, %arg2: memref<1x32x16xbf16, #tpu.memory_space<vmem>>, %arg3: memref<32x32xbf16, #tpu.memory_space<vmem>>, %arg4: memref<32x1xf32, #tpu.memory_space<vmem>>, %arg5: memref<1x32x16xf32, #tpu.memory_space<vmem>>) attributes {dimension_semantics = [#tpu.dimension_semantics<parallel>, #tpu.dimension_semantics<parallel>], iteration_bounds = array<i64: 2, 1>, scalar_prefetch = 0 : i64, scratch_operands = 0 : i64, tpu.core_type = #tpu.core_type<tc>, window_params = [{transform_indices = @transform_0, window_bounds = array<i64: 1, 32, 16>}, {pipeline_mode = #tpu.pipeline_mode<synchronous>, transform_indices = @transform_1, window_bounds = array<i64: 32, 32>}, {pipeline_mode = #tpu.pipeline_mode<synchronous>, transform_indices = @transform_2, window_bounds = array<i64: 32, 1>}, {transform_indices = @transform_3, window_bounds = array<i64: 1, 32, 16>}]} {
    %c0 = arith.constant 0 : index
    %c0_0 = arith.constant 0 : index
    %0 = vector.load %arg3[%c0, %c0_0] : memref<32x32xbf16, #tpu.memory_space<vmem>>, vector<32x32xbf16>
    %c0_1 = arith.constant 0 : index
    %c0_2 = arith.constant 0 : index
    %c0_3 = arith.constant 0 : index
    %1 = vector.load %arg2[%c0_1, %c0_2, %c0_3] : memref<1x32x16xbf16, #tpu.memory_space<vmem>>, vector<1x32x16xbf16>
    %2 = vector.shape_cast %1 : vector<1x32x16xbf16> to vector<32x16xbf16>
    %cst = arith.constant dense<0.000000e+00> : vector<32x16xf32>
    %3 = tpu.matmul %0, %2, %cst {dimension_numbers = #tpu.dot_dimension_numbers<[1], [0], [0], [1], [0, 0, 1, 1], [], []>} : vector<32x32xbf16>, vector<32x16xbf16>, vector<32x16xf32> -> vector<32x16xf32>
    %c0_4 = arith.constant 0 : index
    %c0_5 = arith.constant 0 : index
    %4 = vector.load %arg4[%c0_4, %c0_5] : memref<32x1xf32, #tpu.memory_space<vmem>>, vector<32x1xf32>
    %5 = vector.broadcast %4 : vector<32x1xf32> to vector<32x16xf32>
    %6 = arith.addf %3, %5 : vector<32x16xf32>
    %cst_6 = arith.constant dense<0xFF800000> : vector<16xf32>
    %7 = vector.multi_reduction <maximumf>, %6, %cst_6 [0] : vector<32x16xf32> to vector<16xf32>
    %8 = vector.shape_cast %7 : vector<16xf32> to vector<1x16xf32>
    %9 = vector.broadcast %8 : vector<1x16xf32> to vector<32x16xf32>
    %10 = arith.subf %6, %9 : vector<32x16xf32>
    %11 = math.exp %10 : vector<32x16xf32>
    %cst_7 = arith.constant dense<0.000000e+00> : vector<16xf32>
    %12 = vector.multi_reduction <add>, %11, %cst_7 [0] : vector<32x16xf32> to vector<16xf32>
    %13 = vector.shape_cast %12 : vector<16xf32> to vector<1x16xf32>
    %14 = math.log %13 : vector<1x16xf32>
    %15 = vector.broadcast %14 : vector<1x16xf32> to vector<32x16xf32>
    %16 = arith.subf %10, %15 : vector<32x16xf32>
    %c0_8 = arith.constant 0 : index
    %c0_9 = arith.constant 0 : index
    %c0_10 = arith.constant 0 : index
    %17 = vector.load %arg5[%c0_8, %c0_9, %c0_10] : memref<1x32x16xf32, #tpu.memory_space<vmem>>, vector<1x32x16xf32>
    %18 = vector.shape_cast %17 : vector<1x32x16xf32> to vector<32x16xf32>
    %19 = vector.shape_cast %16 : vector<32x16xf32> to vector<1x32x16xf32>
    tpu.vector_store %arg5[%c0_8, %c0_9, %c0_10], %19 {strides = array<i32>} : memref<1x32x16xf32, #tpu.memory_space<vmem>>, vector<1x32x16xf32>,
    return
  }
  func.func @transform_0(%arg0: i32, %arg1: i32) -> (i32, i32, i32) {
    %c0_i32 = arith.constant 0 : i32
    %c0_i32_0 = arith.constant 0 : i32
    return %arg0, %c0_i32, %arg1 : i32, i32, i32
  }
  func.func @transform_1(%arg0: i32, %arg1: i32) -> (i32, i32) {
    %c0_i32 = arith.constant 0 : i32
    %c0_i32_0 = arith.constant 0 : i32
    %c0_i32_1 = arith.constant 0 : i32
    return %c0_i32, %c0_i32_0 : i32, i32
  }
  func.func @transform_2(%arg0: i32, %arg1: i32) -> (i32, i32) {
    %c0_i32 = arith.constant 0 : i32
    %c0_i32_0 = arith.constant 0 : i32
    %c0_i32_1 = arith.constant 0 : i32
    return %c0_i32, %c0_i32_0 : i32, i32
  }
  func.func @transform_3(%arg0: i32, %arg1: i32) -> (i32, i32, i32) {
    %c0_i32 = arith.constant 0 : i32
    %c0_i32_0 = arith.constant 0 : i32
    return %arg0, %c0_i32, %arg1 : i32, i32, i32
  }
}

</mosaic_0001>

<llo_original>
// kernel: wav2vec_ctc_forward.1
$region0: #{wav2vec_ctc_forward.1}
  #allocation0 [shape = 'u32[]', space=smem, size = 0x4, offset = 0x4, fixed_abs, tag = 'smem constant byte address 0x4 - core index']
  #allocation1 [shape = 'u32[144,128]{1,0:T(1,128)}', space=vmem, size = 0x12000, scoped, tag = 'internal scratch']
  %s0 = inlined_call_operand.vmem [shape: bf16[2,32,16], index: 0, kind: input, shape index: {}]
  %s1 = inlined_call_operand.vmem [shape: bf16[32,32], index: 1, kind: input, shape index: {}]
  %s2 = inlined_call_operand.vmem [shape: f32[32,1], index: 2, kind: input, shape index: {}]
  %s3 = inlined_call_operand.vmem [shape: f32[2,32,16], index: 3, kind: output, shape index: {}]
  %s4 = sld [smem:[#allocation0]]
  $region45: #{wav2vec_ctc_forward.1} parent=0
    _
  %s6 = ssub.s32 1, %s4
  %s7 = scalar_select 0, %s6, %s4
  loop: start=0, step=1, limit=4
  $region2: #{wav2vec_ctc_forward.1} parent=0 // loop_pre_header
    _
  $region3: #{wav2vec_ctc_forward.1} parent=0 // loop_header
    %s9 = sphi 0, %s13
    %p10 = scmp.ge.s32.totalorder %s9, 4
    %s16 = sphi 0, %s28
    %s17 = sphi 0, %s24
    %s18 = sphi 0, %s16
    %s19 = sphi 0, %s17
    %s20 = sphi 0, %s18
    %s21 = sphi 0, %s19
    %s33 = sphi 0, %s35
    %s36 = sphi 0, %s33
    %s37 = sphi 0, %s36
    %s53 = sphi 0, %s37
    %s57 = sphi 0, %s57
    %s59 = sphi 0, %s57
    %s60 = sphi 0, %s59
    %s74 = sphi 0, %s60
    %s78 = sphi 0, %s78
    %s80 = sphi 0, %s78
    %s81 = sphi 0, %s80
    %s95 = sphi 0, %s81
    %s103 = sphi 0, %s105
    %s106 = sphi 0, %s103
    %s107 = sphi 0, %s106
    %s123 = sphi 0, %s107
  $region4: #{wav2vec_ctc_forward.1} parent=0 // loop_header_branch
    %12 = sbr.rel (%p10) target = $region8
  $region5: #{wav2vec_ctc_forward.1} parent=0 // loop_body
    %s14 = ssub.s32 %s9, 1
    %s15 = ssub.s32 %s9, 2
    %s22 = sadd.s32 1, %s17
    %p23 = scmp.ge.s32.totalorder %s22, 1
    %s24 = scalar_select %p23, 0, %s22
    %s25 = sadd.s32 1, %s16
    %s26 = scalar_select %p23, %s25, %s16
    %p27 = scmp.ge.s32.totalorder %s26, 2
    %s28 = scalar_select %p27, 0, %s26
    %s29 = ssub.s32 %s16, %s28
    %s30 = ssub.s32 %s17, %s24
    %s31 = sor.u32 %s29, %s30
    %p32 = scmp.eq.s32.totalorder %s31, 0
    %s34 = sadd.s32 %s33, 1
    %s35 = scalar_select %p32, %s33, %s34
    %p38 = pneg %p32
    %p39 = scmp.eq.s32.totalorder %s9, 1
    %p40 = por %p38, %p39
    %p41 = scmp.ne.s32.totalorder %s33, %s36
    %p42 = scmp.eq.s32.totalorder %s9, 0
    %p43 = por %p41, %p42
    %p44 = scmp.ne.s32.totalorder %s33, %s36
    %p45 = scmp.eq.s32.totalorder %s14, 1
    %p46 = por %p44, %p45
    %p47 = scmp.ne.s32.totalorder %s36, %s37
    %p48 = scmp.eq.s32.totalorder %s14, 0
    %p49 = por %p47, %p48
    %p50 = scmp.ne.s32.totalorder %s36, %s37
    %p51 = scmp.eq.s32.totalorder %s15, 1
    %p52 = por %p50, %p51
    %p54 = scmp.ne.s32.totalorder %s37, %s53
    %p55 = scmp.eq.s32.totalorder %s15, 0
    %p56 = por %p54, %p55
    %s58 = sadd.s32 %s57, 1
    %p61 = scmp.eq.s32.totalorder %s9, 1
    %p62 = scmp.ne.s32.totalorder %s57, %s59
    %p63 = scmp.eq.s32.totalorder %s9, 0
    %p64 = por %p62, %p63
    %p65 = scmp.ne.s32.totalorder %s57, %s59
    %p66 = scmp.eq.s32.totalorder %s14, 1
    %p67 = por %p65, %p66
    %p68 = scmp.ne.s32.totalorder %s59, %s60
    %p69 = scmp.eq.s32.totalorder %s14, 0
    %p70 = por %p68, %p69
    %p71 = scmp.ne.s32.totalorder %s59, %s60
    %p72 = scmp.eq.s32.totalorder %s15, 1
    %p73 = por %p71, %p72
    %p75 = scmp.ne.s32.totalorder %s60, %s74
    %p76 = scmp.eq.s32.totalorder %s15, 0
    %p77 = por %p75, %p76
    %s79 = sadd.s32 %s78, 1
    %p82 = scmp.eq.s32.totalorder %s9, 1
    %p83 = scmp.ne.s32.totalorder %s78, %s80
    %p84 = scmp.eq.s32.totalorder %s9, 0
    %p85 = por %p83, %p84
    %p86 = scmp.ne.s32.totalorder %s78, %s80
    %p87 = scmp.eq.s32.totalorder %s14, 1
    %p88 = por %p86, %p87
    %p89 = scmp.ne.s32.totalorder %s80, %s81
    %p90 = scmp.eq.s32.totalorder %s14, 0
    %p91 = por %p89, %p90
    %p92 = scmp.ne.s32.totalorder %s80, %s81
    %p93 = scmp.eq.s32.totalorder %s15, 1
    %p94 = por %p92, %p93
    %p96 = scmp.ne.s32.totalorder %s81, %s95
    %p97 = scmp.eq.s32.totalorder %s15, 0
    %p98 = por %p96, %p97
    %s99 = ssub.s32 %s16, %s28
    %s100 = ssub.s32 %s17, %s24
    %s101 = sor.u32 %s99, %s100
    %p102 = scmp.eq.s32.totalorder %s101, 0
    %s104 = sadd.s32 %s103, 1
    %s105 = scalar_select %p102, %s103, %s104
    %p108 = pneg %p102
    %p109 = scmp.eq.s32.totalorder %s9, 1
    %p110 = por %p108, %p109
    %p111 = scmp.ne.s32.totalorder %s103, %s106
    %p112 = scmp.eq.s32.totalorder %s9, 0
    %p113 = por %p111, %p112
    %p114 = scmp.ne.s32.totalorder %s103, %s106
    %p115 = scmp.eq.s32.totalorder %s14, 1
    %p116 = por %p114, %p115
    %p117 = scmp.ne.s32.totalorder %s106, %s107
    %p118 = scmp.eq.s32.totalorder %s14, 0
    %p119 = por %p117, %p118
    %p120 = scmp.ne.s32.totalorder %s106, %s107
    %p121 = scmp.eq.s32.totalorder %s15, 1
    %p122 = por %p120, %p121
    %p124 = scmp.ne.s32.totalorder %s107, %s123
    %p125 = scmp.eq.s32.totalorder %s15, 0
    %p126 = por %p124, %p125
    %p127 = scmp.le.s32.totalorder 1, %s9
    %p128 = scmp.lt.s32.totalorder %s9, 3
    %p129 = pnand %p127, %p128
    %p130 = pneg %p129
    // Predicated region
    $region9: #{wav2vec_ctc_forward.1} parent=5 // pred_check
      _
    $region10: #{wav2vec_ctc_forward.1} parent=5 // pred_check_branch
      %132 = sbr.rel (%p129) target = $region12
    $region11: #{wav2vec_ctc_forward.1} parent=5 // pred_region
      %s133 = ssub.s32 %s9, 1
      // Predicated region
      $region13: #{wav2vec_ctc_forward.1} parent=11 // pred_check
        %p134 = pneg %p70
      $region14: #{wav2vec_ctc_forward.1} parent=11 // pred_check_branch
        %136 = sbr.rel (%p134) target = $region16
      $region15: #{wav2vec_ctc_forward.1} parent=11 // pred_region
        _
      $region16: #{wav2vec_ctc_forward.1} parent=11 // pred_fallthru
        _
      // Predicated region
      $region17: #{wav2vec_ctc_forward.1} parent=11 // pred_check
        %p137 = pneg %p91
      $region18: #{wav2vec_ctc_forward.1} parent=11 // pred_check_branch
        %139 = sbr.rel (%p137) target = $region20
      $region19: #{wav2vec_ctc_forward.1} parent=11 // pred_region
        _
      $region20: #{wav2vec_ctc_forward.1} parent=11 // pred_fallthru
        _
    $region12: #{wav2vec_ctc_forward.1} parent=5 // pred_fallthru
      _
    %p140 = scmp.lt.s32.totalorder %s9, 2
    // Predicated region
    $region21: #{wav2vec_ctc_forward.1} parent=5 // pred_check
      %p141 = pneg %p140
    $region22: #{wav2vec_ctc_forward.1} parent=5 // pred_check_branch
      %143 = sbr.rel (%p141) target = $region24
    $region23: #{wav2vec_ctc_forward.1} parent=5 // pred_region
      // Predicated region
      $region25: #{wav2vec_ctc_forward.1} parent=23 // pred_check
        %p144 = pneg %p43
      $region26: #{wav2vec_ctc_forward.1} parent=23 // pred_check_branch
        %146 = sbr.rel (%p144) target = $region28
      $region27: #{wav2vec_ctc_forward.1} parent=23 // pred_region
        %p147 = scmp.lt.s32.totalorder %s16, 1
        %s148 = scalar_select %p147, %s16, 1
        %p149 = scmp.lt.s32.totalorder %s17, 0
        %s150 = scalar_select %p149, %s17, 0
        %s151 = smul.addr %s148, 4
        %s152 = sadd.s32 %s150, %s151
        %s153 = smul.addr %s152, 4
        %s154 = scalar_lea.vmem %s0, %s153
      $region28: #{wav2vec_ctc_forward.1} parent=23 // pred_fallthru
        _
    $region24: #{wav2vec_ctc_forward.1} parent=5 // pred_fallthru
      _
    %p155 = scmp.le.s32.totalorder 1, %s9
    %p156 = scmp.lt.s32.totalorder %s9, 3
    %p157 = pnand %p155, %p156
    %p158 = pneg %p157
    // Predicated region
    $region29: #{wav2vec_ctc_forward.1} parent=5 // pred_check
      _
    $region30: #{wav2vec_ctc_forward.1} parent=5 // pred_check_branch
      %160 = sbr.rel (%p157) target = $region32
    $region31: #{wav2vec_ctc_forward.1} parent=5 // pred_region
      %s161 = ssub.s32 %s9, 1
      %p162 = scmp.lt.s32.totalorder %s18, 1
      %s163 = scalar_select %p162, %s18, 1
      %p164 = scmp.lt.s32.totalorder %s19, 0
      %s165 = scalar_select %p164, %s19, 0
      %s166 = smul.addr %s163, 4
      %s167 = sadd.s32 %s165, %s166
      %s168 = smul.addr %s167, 4
      %s169 = scalar_lea.vmem %s0, %s168
      %p170 = pneg %p49
      %p171 = pneg %p46
      %p172 = pneg %p70
      %p173 = pneg %p67
      %p174 = pneg %p91
      %p175 = pneg %p88
      %p176 = pneg %p119
      %p177 = pneg %p116
      %p178 = scmp.lt.s32.totalorder %s18, 1
      %s179 = scalar_select %p178, %s18, 1
      %p180 = scmp.lt.s32.totalorder %s19, 0
      %s181 = scalar_select %p180, %s19, 0
      %s182 = smul.addr %s179, 4
      %s183 = sadd.s32 %s181, %s182
      %s184 = smul.addr %s183, 8
      %s185 = scalar_lea.vmem %s3, %s184
      %p186 = scmp.lt.s32.totalorder %s18, 1
      %s187 = scalar_select %p186, %s18, 1
      %p188 = scmp.lt.s32.totalorder %s19, 0
      %s189 = scalar_select %p188, %s19, 0
      %s190 = smul.addr %s187, 4
      %s191 = sadd.s32 %s189, %s190
      %s192 = smul.addr %s191, 4
      %s193 = scalar_lea.vmem %s0, %s192
      %p194 = scmp.lt.s32.totalorder %s18, 1
      %s195 = scalar_select %p194, %s18, 1
      %p196 = scmp.lt.s32.totalorder %s19, 0
      %s197 = scalar_select %p196, %s19, 0
      %s198 = smul.addr %s195, 4
      %s199 = sadd.s32 %s197, %s198
      %s200 = smul.addr %s199, 8
      %s201 = scalar_lea.vmem %s3, %s200
      %v203 = vld [vmem:[%s1] sm:$0xf]
      %v204 = vld [vmem:[%s1 + $0x4] sm:$0xf]
      %v205 = vld [vmem:[%s1 + $0x8] sm:$0xf]
      %v206 = vld [vmem:[%s1 + $0xc] sm:$0xf]
      %v207 = vld [vmem:[%s193] sm:$0xf]
      %v208 = vld [vmem:[%s193 + $0x4] sm:$0xf]
      %v209 = vld [vmem:[%s193 + $0x8] sm:$0xf]
      %v210 = vld [vmem:[%s193 + $0xc] sm:$0xf]
      %v211 = vld [vmem:[%s2] sm:$0xff]
      %v212 = vld [vmem:[%s2 + $0x8] sm:$0xff]
      %v213 = vld [vmem:[%s2 + $0x10] sm:$0xff]
      %v214 = vld [vmem:[%s2 + $0x18] sm:$0xff]
      %216 = vset.pattern.permute.xlu0 0
      %217 = vperm.xlu0 %216, %v211
      %v218 = vpop.permute.xlu0 %217
      %221 = vset.pattern.permute.xlu0 0
      %222 = vperm.xlu0 %221, %v212
      %v223 = vpop.permute.xlu0 %222
      %226 = vset.pattern.permute.xlu0 0
      %227 = vperm.xlu0 %226, %v213
      %v228 = vpop.permute.xlu0 %227
      %231 = vset.pattern.permute.xlu0 0
      %232 = vperm.xlu0 %231, %v214
      %v233 = vpop.permute.xlu0 %232
      %v239 = vunpack.c.l.b16 %v203
      %v240 = vunpack.c.l.b16 %v204
      %v241 = vunpack.c.l.b16 %v205
      %v242 = vunpack.c.l.b16 %v206
      %v243 = vpack.c.b16 %v240, %v239
      %v244 = vpack.c.b16 %v242, %v241
      %v249 = vunpack.c.l.b16 %v207
      %v250 = vunpack.c.l.b16 %v208
      %v251 = vunpack.c.l.b16 %v209
      %v252 = vunpack.c.l.b16 %v210
      %v253 = vpack.c.b16 %v250, %v249
      %v254 = vpack.c.b16 %v252, %v251
      %vm257 = vcmask 261120
      %v259 = vsel %vm257, %v243, 0
      %v262 = vsel %vm257, %v244, 0
      %264 = vmatprep.subr.bf16.mxu0 0
      %265 = vmatpush1.bf16.msra.mxu0 0
      %266 = vmatprep.subr.bf16.mxu0 0
      %267 = vmatpush1.bf16.msra.mxu0 0
      %268 = vmatprep.subr.bf16.mxu0 0
      %269 = vmatpush1.bf16.msra.mxu0 0
      %270 = vmatprep.subr.bf16.mxu0 0
      %271 = vmatpush1.bf16.msra.mxu0 0
      %272 = vmatprep.subr.bf16.mxu0 0
      %273 = vmatpush1.bf16.msra.mxu0 0
      %274 = vmatprep.subr.bf16.mxu0 0
      %275 = vmatpush1.bf16.msra.mxu0 0
      %276 = vmatprep.subr.bf16.mxu0 0
      %277 = vmatpush1.bf16.msra.mxu0 %v254
      %278 = vmatprep.subr.bf16.mxu0 0
      %279 = vmatpush1.bf16.msra.mxu0 %v253
      %280 = vmatprep.subr.bf16.mxu0 0
      %281 = vmatpush2.bf16.msra.mxu0 0
      %282 = vmatprep.subr.bf16.mxu0 0
      %283 = vmatpush2.bf16.msra.mxu0 0
      %284 = vmatprep.subr.bf16.mxu0 0
      %285 = vmatpush2.bf16.msra.mxu0 0
      %286 = vmatprep.subr.bf16.mxu0 0
      %287 = vmatpush2.bf16.msra.mxu0 0
      %288 = vmatprep.subr.bf16.mxu0 0
      %289 = vmatpush2.bf16.msra.mxu0 0
      %290 = vmatprep.subr.bf16.mxu0 0
      %291 = vmatpush2.bf16.msra.mxu0 0
      %292 = vmatprep.subr.bf16.mxu0 0
      %293 = vmatpush2.bf16.msra.mxu0 0
      %294 = vmatprep.subr.bf16.mxu0 0
      %295 = vmatpush2.bf16.msra.mxu0 0
      %296 = vmatprep.mubr.bf16.mxu0 0
      %297 = vmatmul.mubr.bf16.gmra.mxu0 %v259
      %v298 = vpop.f32.mrf.mxu0
      %v299 = vadd.f32 %v218, %v298
      %v300 = vpop.f32.mrf.mxu0
      %v301 = vpop.f32.mrf.mxu0
      %v302 = vadd.f32 %v223, %v301
      %v303 = vpop.f32.mrf.mxu0
      %304 = vmatprep.mubr.bf16.mxu0 0
      %305 = vmatmul.mubr.bf16.gmra.mxu0 %v262
      %v306 = vpop.f32.mrf.mxu0
      %v307 = vadd.f32 %v228, %v306
      %v308 = vpop.f32.mrf.mxu0
      %v309 = vpop.f32.mrf.mxu0
      %v310 = vadd.f32 %v233, %v309
      %v311 = vpop.f32.mrf.mxu0
      %312 = vdwg.mxu0
      %vm313 = vcmask 130048
      %v314 = vsel %vm313, %v299, -inf
      %v315 = vsel %vm313, %v302, -inf
      %v316 = vsel %vm313, %v307, -inf
      %v317 = vsel %vm313, %v310, -inf
      %v318 = vmax.f32 %v314, %v315
      %v319 = vmax.f32 %v316, %v317
      %v320 = vmax.f32 %v318, %v319
      %v321 = vrot.slane %v320, 4
      %v322 = vmax.f32 %v320, %v321
      %v323 = vrot.slane %v322, 2
      %v324 = vmax.f32 %v322, %v323
      %v325 = vrot.slane %v324, 1
      %v326 = vmax.f32 %v324, %v325
      %v327 = vsub.f32 %v299, %v326
      %v328 = vsub.f32 %v302, %v326
      %v329 = vsub.f32 %v307, %v326
      %v330 = vsub.f32 %v310, %v326
      %v331 = vmul.f32 %v327, 1.442695
      %v332 = vpow.pop %v331
      %v333 = vmul.f32 %v328, 1.442695
      %v334 = vpow.pop %v333
      %v335 = vmul.f32 %v329, 1.442695
      %v336 = vpow.pop %v335
      %v337 = vmul.f32 %v330, 1.442695
      %v338 = vpow.pop %v337
      %v339 = vsel %vm313, %v332, 0.0
      %v340 = vsel %vm313, %v334, 0.0
      %v341 = vadd.f32 %v339, %v340
      %v342 = vsel %vm313, %v336, 0.0
      %v343 = vadd.f32 %v341, %v342
      %v344 = vsel %vm313, %v338, 0.0
      %v345 = vadd.f32 %v343, %v344
      %v346 = vrot.slane %v345, 4
      %v347 = vadd.f32 %v345, %v346
      %v348 = vrot.slane %v347, 2
      %v349 = vadd.f32 %v347, %v348
      %v350 = vrot.slane %v349, 1
      %v351 = vadd.f32 %v349, %v350
      %v352 = vlog2.pop %v351
      %v353 = vmul.f32 %v352, 0.6931472
      %v354 = vsub.f32 %v327, %v353
      %v355 = vsub.f32 %v328, %v353
      %v356 = vsub.f32 %v329, %v353
      %v357 = vsub.f32 %v330, %v353
      %358 = vst.msk [vmem:[%s201] sm:$0xff] %vm313, %v354
      %359 = vst.msk [vmem:[%s201 + $0x8] sm:$0xff] %vm313, %v355
      %360 = vst.msk [vmem:[%s201 + $0x10] sm:$0xff] %vm313, %v356
      %361 = vst.msk [vmem:[%s201 + $0x18] sm:$0xff] %vm313, %v357
      %p362 = scmp.lt.s32.totalorder %s18, 1
      %s363 = scalar_select %p362, %s18, 1
      %p364 = scmp.lt.s32.totalorder %s19, 0
      %s365 = scalar_select %p364, %s19, 0
      %s366 = smul.addr %s363, 4
      %s367 = sadd.s32 %s365, %s366
      %s368 = smul.addr %s367, 8
      %s369 = scalar_lea.vmem %s3, %s368
      // Predicated region
      $region33: #{wav2vec_ctc_forward.1} parent=31 // pred_check
        %p370 = pneg %p116
      $region34: #{wav2vec_ctc_forward.1} parent=31 // pred_check_branch
        %372 = sbr.rel (%p370) target = $region36
      $region35: #{wav2vec_ctc_forward.1} parent=31 // pred_region
        _
      $region36: #{wav2vec_ctc_forward.1} parent=31 // pred_fallthru
        _
    $region32: #{wav2vec_ctc_forward.1} parent=5 // pred_fallthru
      _
    %p373 = scmp.le.s32.totalorder 2, %s9
    // Predicated region
    $region37: #{wav2vec_ctc_forward.1} parent=5 // pred_check
      %p374 = pneg %p373
    $region38: #{wav2vec_ctc_forward.1} parent=5 // pred_check_branch
      %376 = sbr.rel (%p374) target = $region40
    $region39: #{wav2vec_ctc_forward.1} parent=5 // pred_region
      %s377 = ssub.s32 %s9, 2
      // Predicated region
      $region41: #{wav2vec_ctc_forward.1} parent=39 // pred_check
        %p378 = pneg %p122
      $region42: #{wav2vec_ctc_forward.1} parent=39 // pred_check_branch
        %380 = sbr.rel (%p378) target = $region44
      $region43: #{wav2vec_ctc_forward.1} parent=39 // pred_region
        %p381 = scmp.lt.s32.totalorder %s20, 1
        %s382 = scalar_select %p381, %s20, 1
        %p383 = scmp.lt.s32.totalorder %s21, 0
        %s384 = scalar_select %p383, %s21, 0
        %s385 = smul.addr %s382, 4
        %s386 = sadd.s32 %s384, %s385
        %s387 = smul.addr %s386, 8
        %s388 = scalar_lea.vmem %s3, %s387
      $region44: #{wav2vec_ctc_forward.1} parent=39 // pred_fallthru
        _
    $region40: #{wav2vec_ctc_forward.1} parent=5 // pred_fallthru
      _
  $region6: #{wav2vec_ctc_forward.1} parent=0 // loop_footer
    %s13 = sadd.s32 1, %s9
  $region7: #{wav2vec_ctc_forward.1} parent=0 // loop_footer_branch
    %8 = sbr.rel target = $region3
  $region8: #{wav2vec_ctc_forward.1} parent=0 // loop_exit
    _

</llo_original>
